<compile_context>
chip_gen: v6e
topology: v6e:2x2x1
jax: 0.10.0
libtpu: 0.0.40
codegen_flags: <defaults>
</compile_context>

<pallas_src>
import jax
import jax.numpy as jnp
from jax import lax
from jax.experimental import pallas as pl
from jax.experimental.pallas import tpu as pltpu


# ---------------------------------------------------------------------------
# Fused kernel factory: conv1+BN1+ReLU -> conv2+BN2+residual+ReLU in VMEM.
# ---------------------------------------------------------------------------
def _make_basic_block_kernel(H, W, C, margin):
    S = H * W
    taps = [(dy, dx) for dy in (-1, 0, 1) for dx in (-1, 0, 1)]

    def kernel(x_ref, xmask_ref, w1_ref, b1_ref, w2_ref, b2_ref, o_ref,
               abuf_ref, patches_ref):
        # x_ref:       (1, C, S)  one image, channels-first, spatial on lanes
        # xmask_ref:   (2, S)     row 0: 0 where x==0 (dx=-1), row 1: 0 where x==W-1 (dx=+1)
        # w1/w2_ref:   (C, 9*C)   im2col conv weights with BN scale folded in (f32)
        # b1/b2_ref:   (C, 1)     folded BN bias
        # o_ref:       (1, C, S)
        # abuf_ref:    VMEM (C, margin + S + margin) staging buffer with zero halo
        # patches_ref: VMEM (9*C, S) im2col patches, lane-dense

        # Zero only the halo margins (not whole buffers).  Unconditional on
        # purpose: scratch is per-core, and under a megacore batch split a core
        # may never execute grid step 0.  Cost: two (C, 128) stores.
        abuf_ref[:, :margin] = jnp.zeros((C, margin), jnp.float32)
        abuf_ref[:, margin + S:] = jnp.zeros((C, margin), jnp.float32)

        def conv3x3(a, w_ref):
            # a: (C, S) f32 activation.  Stage into the halo buffer (aligned
            # store), build the 9 taps as static lane-offset reads (vertical
            # out-of-image taps fall into the zero margins; horizontal wrap is
            # masked), then ONE MXU matmul with lane-dense (C, S) output.
            abuf_ref[:, margin:margin + S] = a
            for t, (dy, dx) in enumerate(taps):
                d = dy * W + dx
                slab = abuf_ref[:, margin + d: margin + d + S]
                if dx == -1:
                    slab = slab * xmask_ref[0:1, :]
                elif dx == 1:
                    slab = slab * xmask_ref[1:2, :]
                # 8-sublane-aligned, full-lane store (no masked vst).
                patches_ref[t * C:(t + 1) * C, :] = slab
            # (C, 9C) @ (9C, S) -> (C, S): M=C, K=9C, N=S (N=256 lane columns).
            return jnp.dot(w_ref[...], patches_ref[...],
                           preferred_element_type=jnp.float32)

        # conv1 -> folded BN1 -> ReLU (f32 epilogue on the accumulator).
        y = conv3x3(x_ref[0].astype(jnp.float32), w1_ref)
        y = jnp.maximum(y + b1_ref[...], 0.0)

        # conv2 -> folded BN2 -> +residual -> ReLU.  Residual is re-read from
        # x_ref here (not held live across both convs).
        y = conv3x3(y, w2_ref)
        y = y + b2_ref[...] + x_ref[0].astype(jnp.float32)
        o_ref[0] = jnp.maximum(y, 0.0).astype(o_ref.dtype)

    return kernel


# ---------------------------------------------------------------------------
# Wrapper
# ---------------------------------------------------------------------------
def basic_block_forward(x_nchw, params):
    """Fused BasicBlock forward (stride=1, no downsample, nonlin=True), NCHW in/out."""
    N, C, H, W = x_nchw.shape
    S = H * W
    w1, w2 = params["w1"], params["w2"]          # (3, 3, Cin, Cout) HWIO
    Cout = w1.shape[-1]
    assert Cout == C, "demo config has inplanes == planes (stride=1, no downsample)"
    assert W + 1 <= 128, "halo margin assumes W+1 <= 128"
    margin = 128                                  # lane-aligned zero halo per side

    # Fold BN scale into conv weights; HWIO -> (Cout, 9*Cin) im2col matrix whose
    # column index t*Cin + ci matches the kernel's patch row layout
    # (t = (dy+1)*3 + (dx+1), i.e. ky*3 + kx).
    def fold(w, s):
        wm = (w * s[None, None, None, :]).reshape(9 * C, Cout)   # rows: (ky*3+kx)*Cin + ci
        return jnp.transpose(wm).astype(jnp.float32)             # (Cout, 9*Cin)

    w1m = fold(w1, params["s1"])
    w2m = fold(w2, params["s2"])
    b1 = params["b1"].reshape(Cout, 1).astype(jnp.float32)
    b2 = params["b2"].reshape(Cout, 1).astype(jnp.float32)

    # Horizontal-wrap masks (vertical out-of-image taps are absorbed by the
    # zero margins of the staging buffer).
    xx = jnp.arange(S, dtype=jnp.int32) % W
    xmask = jnp.stack([(xx != 0), (xx != W - 1)], axis=0).astype(jnp.float32)  # (2, S)

    x2 = x_nchw.reshape(N, C, S)                  # free reshape; S on lanes

    kernel = _make_basic_block_kernel(H, W, C, margin)
    out = pl.pallas_call(
        kernel,
        out_shape=jax.ShapeDtypeStruct((N, C, S), x_nchw.dtype),
        grid=(N,),
        in_specs=[
            pl.BlockSpec((1, C, S), lambda b: (b, 0, 0)),        # x (lane-dense)
            pl.BlockSpec((2, S), lambda b: (0, 0)),              # x-wrap masks
            pl.BlockSpec((Cout, 9 * C), lambda b: (0, 0)),       # conv1 weights (BN folded)
            pl.BlockSpec((Cout, 1), lambda b: (0, 0)),           # bias1
            pl.BlockSpec((Cout, 9 * Cout), lambda b: (0, 0)),    # conv2 weights (BN folded)
            pl.BlockSpec((Cout, 1), lambda b: (0, 0)),           # bias2
        ],
        out_specs=pl.BlockSpec((1, C, S), lambda b: (b, 0, 0)),  # lane-dense output
        scratch_shapes=[
            pltpu.VMEM((C, margin + S + margin), jnp.float32),   # halo staging buffer
            pltpu.VMEM((9 * C, S), jnp.float32),                 # im2col patches
        ],
        # TODO(synk): on v7x, pltpu.CORE_PARALLEL (or pl.core_map) would force
        # the batch axis onto both TensorCores; "parallel" is kept here for
        # portability across v5e/v6e/v7x.
        compiler_params=pltpu.CompilerParams(
            dimension_semantics=("parallel",)),
    )(x2, xmask, w1m, b1, w2m, b2)
    return out.reshape(N, C, H, W)


# ---------------------------------------------------------------------------
# Pure-JAX reference (for correctness check)
# ---------------------------------------------------------------------------
def basic_block_reference(x_nchw, params):
    dn = ("NCHW", "HWIO", "NCHW")
    C = x_nchw.shape[1]

    def bn(t, s, b):
        return t * s.reshape(1, C, 1, 1) + b.reshape(1, C, 1, 1)

    out = lax.conv_general_dilated(x_nchw, params["w1"], (1, 1), "SAME",
                                   dimension_numbers=dn,
                                   precision=lax.Precision.HIGHEST)
    out = jnp.maximum(bn(out, params["s1"], params["b1"]), 0.0)
    out = lax.conv_general_dilated(out, params["w2"], (1, 1), "SAME",
                                   dimension_numbers=dn,
                                   precision=lax.Precision.HIGHEST)
    out = bn(out, params["s2"], params["b2"]) + x_nchw
    return jnp.maximum(out, 0.0)


# ---------------------------------------------------------------------------
if __name__ == "__main__":
    # Small shapes consistent with BasicBlock(inplanes=8, planes=8, stride=1).
    N, C, H, W = 2, 8, 16, 16
    eps = 1e-5

    key = jax.random.PRNGKey(0)
    k = jax.random.split(key, 7)

    # Conv weights (HWIO), deterministic init.
    w1 = jax.random.normal(k[0], (3, 3, C, C), jnp.float32) * 0.1
    w2 = jax.random.normal(k[1], (3, 3, C, C), jnp.float32) * 0.1

    # BatchNorm params (inference mode: running_mean=0, running_var=1).
    gamma1 = 1.0 + 0.1 * jax.random.normal(k[2], (C,), jnp.float32)
    beta1 = 0.1 * jax.random.normal(k[3], (C,), jnp.float32)
    gamma2 = 1.0 + 0.1 * jax.random.normal(k[4], (C,), jnp.float32)
    beta2 = 0.1 * jax.random.normal(k[5], (C,), jnp.float32)
    run_mean = jnp.zeros((C,), jnp.float32)
    run_var = jnp.ones((C,), jnp.float32)

    s1 = gamma1 / jnp.sqrt(run_var + eps)
    b1 = beta1 - run_mean * s1
    s2 = gamma2 / jnp.sqrt(run_var + eps)
    b2 = beta2 - run_mean * s2

    params = {"w1": w1, "s1": s1, "b1": b1, "w2": w2, "s2": s2, "b2": b2}

    # Input in PyTorch's NCHW layout.
    x_nchw = jax.random.normal(k[6], (N, C, H, W), jnp.float32)

    out = basic_block_forward(x_nchw, params)
    out = jax.block_until_ready(out)

    ref = basic_block_reference(x_nchw, params)
    assert out.shape == (N, C, H, W)
    assert jnp.allclose(out, ref, atol=2e-3, rtol=2e-3), "mismatch vs reference"

    print("KERNEL_OK")
</pallas_src>

<mosaic_0001>
module attributes {stable_mosaic.version = 11 : i64} {
  func.func @kernel(%arg0: i32, %arg1: memref<1x8x256xf32, #tpu.memory_space<vmem>>, %arg2: memref<2x256xf32, #tpu.memory_space<vmem>>, %arg3: memref<8x72xf32, #tpu.memory_space<vmem>>, %arg4: memref<8x1xf32, #tpu.memory_space<vmem>>, %arg5: memref<8x72xf32, #tpu.memory_space<vmem>>, %arg6: memref<8x1xf32, #tpu.memory_space<vmem>>, %arg7: memref<1x8x256xf32, #tpu.memory_space<vmem>>, %arg8: memref<8x512xf32, #tpu.memory_space<vmem>>, %arg9: memref<72x256xf32, #tpu.memory_space<vmem>>) attributes {dimension_semantics = [#tpu.dimension_semantics<parallel>], iteration_bounds = array<i64: 2>, scalar_prefetch = 0 : i64, scratch_operands = 2 : i64, tpu.core_type = #tpu.core_type<tc>, window_params = [{transform_indices = @transform_0, window_bounds = array<i64: 1, 8, 256>}, {pipeline_mode = #tpu.pipeline_mode<synchronous>, transform_indices = @transform_1, window_bounds = array<i64: 2, 256>}, {pipeline_mode = #tpu.pipeline_mode<synchronous>, transform_indices = @transform_2, window_bounds = array<i64: 8, 72>}, {pipeline_mode = #tpu.pipeline_mode<synchronous>, transform_indices = @transform_3, window_bounds = array<i64: 8, 1>}, {pipeline_mode = #tpu.pipeline_mode<synchronous>, transform_indices = @transform_4, window_bounds = array<i64: 8, 72>}, {pipeline_mode = #tpu.pipeline_mode<synchronous>, transform_indices = @transform_5, window_bounds = array<i64: 8, 1>}, {transform_indices = @transform_6, window_bounds = array<i64: 1, 8, 256>}]} {
    %cst = arith.constant 0.000000e+00 : f32
    %0 = vector.broadcast %cst : f32 to vector<8x128xf32>
    %c0 = arith.constant 0 : index
    %c0_0 = arith.constant 0 : index
    %1 = vector.load %arg8[%c0, %c0_0] : memref<8x512xf32, #tpu.memory_space<vmem>>, vector<8x128xf32>
    tpu.vector_store %arg8[%c0, %c0_0], %0 {strides = array<i32>} : memref<8x512xf32, #tpu.memory_space<vmem>>, vector<8x128xf32>,
    %cst_1 = arith.constant 0.000000e+00 : f32
    %2 = vector.broadcast %cst_1 : f32 to vector<8x128xf32>
    %c0_2 = arith.constant 0 : index
    %c384 = arith.constant 384 : index
    %3 = vector.load %arg8[%c0_2, %c384] : memref<8x512xf32, #tpu.memory_space<vmem>>, vector<8x128xf32>
    tpu.vector_store %arg8[%c0_2, %c384], %2 {strides = array<i32>} : memref<8x512xf32, #tpu.memory_space<vmem>>, vector<8x128xf32>,
    %c0_3 = arith.constant 0 : index
    %c0_4 = arith.constant 0 : index
    %c0_5 = arith.constant 0 : index
    %4 = vector.load %arg1[%c0_3, %c0_4, %c0_5] : memref<1x8x256xf32, #tpu.memory_space<vmem>>, vector<1x8x256xf32>
    %5 = vector.shape_cast %4 : vector<1x8x256xf32> to vector<8x256xf32>
    %c0_6 = arith.constant 0 : index
    %c128 = arith.constant 128 : index
    %6 = vector.load %arg8[%c0_6, %c128] : memref<8x512xf32, #tpu.memory_space<vmem>>, vector<8x256xf32>
    tpu.vector_store %arg8[%c0_6, %c128], %5 {strides = array<i32>} : memref<8x512xf32, #tpu.memory_space<vmem>>, vector<8x256xf32>,
    %c0_7 = arith.constant 0 : index
    %c111 = arith.constant 111 : index
    %7 = vector.load %arg8[%c0_7, %c111] : memref<8x512xf32, #tpu.memory_space<vmem>>, vector<8x256xf32>
    %c0_8 = arith.constant 0 : index
    %c0_9 = arith.constant 0 : index
    %8 = vector.load %arg2[%c0_8, %c0_9] : memref<2x256xf32, #tpu.memory_space<vmem>>, vector<1x256xf32>
    %9 = vector.broadcast %8 : vector<1x256xf32> to vector<8x256xf32>
    %10 = arith.mulf %7, %9 : vector<8x256xf32>
    %c0_10 = arith.constant 0 : index
    %c0_11 = arith.constant 0 : index
    %11 = vector.load %arg9[%c0_10, %c0_11] : memref<72x256xf32, #tpu.memory_space<vmem>>, vector<8x256xf32>
    tpu.vector_store %arg9[%c0_10, %c0_11], %10 {strides = array<i32>} : memref<72x256xf32, #tpu.memory_space<vmem>>, vector<8x256xf32>,
    %c0_12 = arith.constant 0 : index
    %c112 = arith.constant 112 : index
    %12 = vector.load %arg8[%c0_12, %c112] : memref<8x512xf32, #tpu.memory_space<vmem>>, vector<8x256xf32>
    %c8 = arith.constant 8 : index
    %c0_13 = arith.constant 0 : index
    %13 = vector.load %arg9[%c8, %c0_13] : memref<72x256xf32, #tpu.memory_space<vmem>>, vector<8x256xf32>
    tpu.vector_store %arg9[%c8, %c0_13], %12 {strides = array<i32>} : memref<72x256xf32, #tpu.memory_space<vmem>>, vector<8x256xf32>,
    %c0_14 = arith.constant 0 : index
    %c113 = arith.constant 113 : index
    %14 = vector.load %arg8[%c0_14, %c113] : memref<8x512xf32, #tpu.memory_space<vmem>>, vector<8x256xf32>
    %c1 = arith.constant 1 : index
    %c0_15 = arith.constant 0 : index
    %15 = vector.load %arg2[%c1, %c0_15] : memref<2x256xf32, #tpu.memory_space<vmem>>, vector<1x256xf32>
    %16 = vector.broadcast %15 : vector<1x256xf32> to vector<8x256xf32>
    %17 = arith.mulf %14, %16 : vector<8x256xf32>
    %c16 = arith.constant 16 : index
    %c0_16 = arith.constant 0 : index
    %18 = vector.load %arg9[%c16, %c0_16] : memref<72x256xf32, #tpu.memory_space<vmem>>, vector<8x256xf32>
    tpu.vector_store %arg9[%c16, %c0_16], %17 {strides = array<i32>} : memref<72x256xf32, #tpu.memory_space<vmem>>, vector<8x256xf32>,
    %c0_17 = arith.constant 0 : index
    %c127 = arith.constant 127 : index
    %19 = vector.load %arg8[%c0_17, %c127] : memref<8x512xf32, #tpu.memory_space<vmem>>, vector<8x256xf32>
    %c0_18 = arith.constant 0 : index
    %c0_19 = arith.constant 0 : index
    %20 = vector.load %arg2[%c0_18, %c0_19] : memref<2x256xf32, #tpu.memory_space<vmem>>, vector<1x256xf32>
    %21 = vector.broadcast %20 : vector<1x256xf32> to vector<8x256xf32>
    %22 = arith.mulf %19, %21 : vector<8x256xf32>
    %c24 = arith.constant 24 : index
    %c0_20 = arith.constant 0 : index
    %23 = vector.load %arg9[%c24, %c0_20] : memref<72x256xf32, #tpu.memory_space<vmem>>, vector<8x256xf32>
    tpu.vector_store %arg9[%c24, %c0_20], %22 {strides = array<i32>} : memref<72x256xf32, #tpu.memory_space<vmem>>, vector<8x256xf32>,
    %c0_21 = arith.constant 0 : index
    %c128_22 = arith.constant 128 : index
    %24 = vector.load %arg8[%c0_21, %c128_22] : memref<8x512xf32, #tpu.memory_space<vmem>>, vector<8x256xf32>
    %c32 = arith.constant 32 : index
    %c0_23 = arith.constant 0 : index
    %25 = vector.load %arg9[%c32, %c0_23] : memref<72x256xf32, #tpu.memory_space<vmem>>, vector<8x256xf32>
    tpu.vector_store %arg9[%c32, %c0_23], %24 {strides = array<i32>} : memref<72x256xf32, #tpu.memory_space<vmem>>, vector<8x256xf32>,
    %c0_24 = arith.constant 0 : index
    %c129 = arith.constant 129 : index
    %26 = vector.load %arg8[%c0_24, %c129] : memref<8x512xf32, #tpu.memory_space<vmem>>, vector<8x256xf32>
    %c1_25 = arith.constant 1 : index
    %c0_26 = arith.constant 0 : index
    %27 = vector.load %arg2[%c1_25, %c0_26] : memref<2x256xf32, #tpu.memory_space<vmem>>, vector<1x256xf32>
    %28 = vector.broadcast %27 : vector<1x256xf32> to vector<8x256xf32>
    %29 = arith.mulf %26, %28 : vector<8x256xf32>
    %c40 = arith.constant 40 : index
    %c0_27 = arith.constant 0 : index
    %30 = vector.load %arg9[%c40, %c0_27] : memref<72x256xf32, #tpu.memory_space<vmem>>, vector<8x256xf32>
    tpu.vector_store %arg9[%c40, %c0_27], %29 {strides = array<i32>} : memref<72x256xf32, #tpu.memory_space<vmem>>, vector<8x256xf32>,
    %c0_28 = arith.constant 0 : index
    %c143 = arith.constant 143 : index
    %31 = vector.load %arg8[%c0_28, %c143] : memref<8x512xf32, #tpu.memory_space<vmem>>, vector<8x256xf32>
    %c0_29 = arith.constant 0 : index
    %c0_30 = arith.constant 0 : index
    %32 = vector.load %arg2[%c0_29, %c0_30] : memref<2x256xf32, #tpu.memory_space<vmem>>, vector<1x256xf32>
    %33 = vector.broadcast %32 : vector<1x256xf32> to vector<8x256xf32>
    %34 = arith.mulf %31, %33 : vector<8x256xf32>
    %c48 = arith.constant 48 : index
    %c0_31 = arith.constant 0 : index
    %35 = vector.load %arg9[%c48, %c0_31] : memref<72x256xf32, #tpu.memory_space<vmem>>, vector<8x256xf32>
    tpu.vector_store %arg9[%c48, %c0_31], %34 {strides = array<i32>} : memref<72x256xf32, #tpu.memory_space<vmem>>, vector<8x256xf32>,
    %c0_32 = arith.constant 0 : index
    %c144 = arith.constant 144 : index
    %36 = vector.load %arg8[%c0_32, %c144] : memref<8x512xf32, #tpu.memory_space<vmem>>, vector<8x256xf32>
    %c56 = arith.constant 56 : index
    %c0_33 = arith.constant 0 : index
    %37 = vector.load %arg9[%c56, %c0_33] : memref<72x256xf32, #tpu.memory_space<vmem>>, vector<8x256xf32>
    tpu.vector_store %arg9[%c56, %c0_33], %36 {strides = array<i32>} : memref<72x256xf32, #tpu.memory_space<vmem>>, vector<8x256xf32>,
    %c0_34 = arith.constant 0 : index
    %c145 = arith.constant 145 : index
    %38 = vector.load %arg8[%c0_34, %c145] : memref<8x512xf32, #tpu.memory_space<vmem>>, vector<8x256xf32>
    %c1_35 = arith.constant 1 : index
    %c0_36 = arith.constant 0 : index
    %39 = vector.load %arg2[%c1_35, %c0_36] : memref<2x256xf32, #tpu.memory_space<vmem>>, vector<1x256xf32>
    %40 = vector.broadcast %39 : vector<1x256xf32> to vector<8x256xf32>
    %41 = arith.mulf %38, %40 : vector<8x256xf32>
    %c64 = arith.constant 64 : index
    %c0_37 = arith.constant 0 : index
    %42 = vector.load %arg9[%c64, %c0_37] : memref<72x256xf32, #tpu.memory_space<vmem>>, vector<8x256xf32>
    tpu.vector_store %arg9[%c64, %c0_37], %41 {strides = array<i32>} : memref<72x256xf32, #tpu.memory_space<vmem>>, vector<8x256xf32>,
    %c0_38 = arith.constant 0 : index
    %c0_39 = arith.constant 0 : index
    %43 = vector.load %arg3[%c0_38, %c0_39] : memref<8x72xf32, #tpu.memory_space<vmem>>, vector<8x72xf32>
    %c0_40 = arith.constant 0 : index
    %c0_41 = arith.constant 0 : index
    %44 = vector.load %arg9[%c0_40, %c0_41] : memref<72x256xf32, #tpu.memory_space<vmem>>, vector<72x256xf32>
    %cst_42 = arith.constant dense<0.000000e+00> : vector<8x256xf32>
    %45 = tpu.matmul %43, %44, %cst_42 {dimension_numbers = #tpu.dot_dimension_numbers<[1], [0], [0], [1], [0, 0, 1, 1], [], []>} : vector<8x72xf32>, vector<72x256xf32>, vector<8x256xf32> -> vector<8x256xf32>
    %c0_43 = arith.constant 0 : index
    %c0_44 = arith.constant 0 : index
    %46 = vector.load %arg4[%c0_43, %c0_44] : memref<8x1xf32, #tpu.memory_space<vmem>>, vector<8x1xf32>
    %47 = vector.broadcast %46 : vector<8x1xf32> to vector<8x256xf32>
    %48 = arith.addf %45, %47 : vector<8x256xf32>
    %cst_45 = arith.constant 0.000000e+00 : f32
    %49 = vector.broadcast %cst_45 : f32 to vector<8x256xf32>
    %50 = arith.maximumf %48, %49 : vector<8x256xf32>
    %c0_46 = arith.constant 0 : index
    %c128_47 = arith.constant 128 : index
    %51 = vector.load %arg8[%c0_46, %c128_47] : memref<8x512xf32, #tpu.memory_space<vmem>>, vector<8x256xf32>
    tpu.vector_store %arg8[%c0_46, %c128_47], %50 {strides = array<i32>} : memref<8x512xf32, #tpu.memory_space<vmem>>, vector<8x256xf32>,
    %c0_48 = arith.constant 0 : index
    %c111_49 = arith.constant 111 : index
    %52 = vector.load %arg8[%c0_48, %c111_49] : memref<8x512xf32, #tpu.memory_space<vmem>>, vector<8x256xf32>
    %c0_50 = arith.constant 0 : index
    %c0_51 = arith.constant 0 : index
    %53 = vector.load %arg2[%c0_50, %c0_51] : memref<2x256xf32, #tpu.memory_space<vmem>>, vector<1x256xf32>
    %54 = vector.broadcast %53 : vector<1x256xf32> to vector<8x256xf32>
    %55 = arith.mulf %52, %54 : vector<8x256xf32>
    %c0_52 = arith.constant 0 : index
    %c0_53 = arith.constant 0 : index
    %56 = vector.load %arg9[%c0_52, %c0_53] : memref<72x256xf32, #tpu.memory_space<vmem>>, vector<8x256xf32>
    tpu.vector_store %arg9[%c0_52, %c0_53], %55 {strides = array<i32>} : memref<72x256xf32, #tpu.memory_space<vmem>>, vector<8x256xf32>,
    %c0_54 = arith.constant 0 : index
    %c112_55 = arith.constant 112 : index
    %57 = vector.load %arg8[%c0_54, %c112_55] : memref<8x512xf32, #tpu.memory_space<vmem>>, vector<8x256xf32>
    %c8_56 = arith.constant 8 : index
    %c0_57 = arith.constant 0 : index
    %58 = vector.load %arg9[%c8_56, %c0_57] : memref<72x256xf32, #tpu.memory_space<vmem>>, vector<8x256xf32>
    tpu.vector_store %arg9[%c8_56, %c0_57], %57 {strides = array<i32>} : memref<72x256xf32, #tpu.memory_space<vmem>>, vector<8x256xf32>,
    %c0_58 = arith.constant 0 : index
    %c113_59 = arith.constant 113 : index
    %59 = vector.load %arg8[%c0_58, %c113_59] : memref<8x512xf32, #tpu.memory_space<vmem>>, vector<8x256xf32>
    %c1_60 = arith.constant 1 : index
    %c0_61 = arith.constant 0 : index
    %60 = vector.load %arg2[%c1_60, %c0_61] : memref<2x256xf32, #tpu.memory_space<vmem>>, vector<1x256xf32>
    %61 = vector.broadcast %60 : vector<1x256xf32> to vector<8x256xf32>
    %62 = arith.mulf %59, %61 : vector<8x256xf32>
    %c16_62 = arith.constant 16 : index
    %c0_63 = arith.constant 0 : index
    %63 = vector.load %arg9[%c16_62, %c0_63] : memref<72x256xf32, #tpu.memory_space<vmem>>, vector<8x256xf32>
    tpu.vector_store %arg9[%c16_62, %c0_63], %62 {strides = array<i32>} : memref<72x256xf32, #tpu.memory_space<vmem>>, vector<8x256xf32>,
    %c0_64 = arith.constant 0 : index
    %c127_65 = arith.constant 127 : index
    %64 = vector.load %arg8[%c0_64, %c127_65] : memref<8x512xf32, #tpu.memory_space<vmem>>, vector<8x256xf32>
    %c0_66 = arith.constant 0 : index
    %c0_67 = arith.constant 0 : index
    %65 = vector.load %arg2[%c0_66, %c0_67] : memref<2x256xf32, #tpu.memory_space<vmem>>, vector<1x256xf32>
    %66 = vector.broadcast %65 : vector<1x256xf32> to vector<8x256xf32>
    %67 = arith.mulf %64, %66 : vector<8x256xf32>
    %c24_68 = arith.constant 24 : index
    %c0_69 = arith.constant 0 : index
    %68 = vector.load %arg9[%c24_68, %c0_69] : memref<72x256xf32, #tpu.memory_space<vmem>>, vector<8x256xf32>
    tpu.vector_store %arg9[%c24_68, %c0_69], %67 {strides = array<i32>} : memref<72x256xf32, #tpu.memory_space<vmem>>, vector<8x256xf32>,
    %c0_70 = arith.constant 0 : index
    %c128_71 = arith.constant 128 : index
    %69 = vector.load %arg8[%c0_70, %c128_71] : memref<8x512xf32, #tpu.memory_space<vmem>>, vector<8x256xf32>
    %c32_72 = arith.constant 32 : index
    %c0_73 = arith.constant 0 : index
    %70 = vector.load %arg9[%c32_72, %c0_73] : memref<72x256xf32, #tpu.memory_space<vmem>>, vector<8x256xf32>
    tpu.vector_store %arg9[%c32_72, %c0_73], %69 {strides = array<i32>} : memref<72x256xf32, #tpu.memory_space<vmem>>, vector<8x256xf32>,
    %c0_74 = arith.constant 0 : index
    %c129_75 = arith.constant 129 : index
    %71 = vector.load %arg8[%c0_74, %c129_75] : memref<8x512xf32, #tpu.memory_space<vmem>>, vector<8x256xf32>
    %c1_76 = arith.constant 1 : index
    %c0_77 = arith.constant 0 : index
    %72 = vector.load %arg2[%c1_76, %c0_77] : memref<2x256xf32, #tpu.memory_space<vmem>>, vector<1x256xf32>
    %73 = vector.broadcast %72 : vector<1x256xf32> to vector<8x256xf32>
    %74 = arith.mulf %71, %73 : vector<8x256xf32>
    %c40_78 = arith.constant 40 : index
    %c0_79 = arith.constant 0 : index
    %75 = vector.load %arg9[%c40_78, %c0_79] : memref<72x256xf32, #tpu.memory_space<vmem>>, vector<8x256xf32>
    tpu.vector_store %arg9[%c40_78, %c0_79], %74 {strides = array<i32>} : memref<72x256xf32, #tpu.memory_space<vmem>>, vector<8x256xf32>,
    %c0_80 = arith.constant 0 : index
    %c143_81 = arith.constant 143 : index
    %76 = vector.load %arg8[%c0_80, %c143_81] : memref<8x512xf32, #tpu.memory_space<vmem>>, vector<8x256xf32>
    %c0_82 = arith.constant 0 : index
    %c0_83 = arith.constant 0 : index
    %77 = vector.load %arg2[%c0_82, %c0_83] : memref<2x256xf32, #tpu.memory_space<vmem>>, vector<1x256xf32>
    %78 = vector.broadcast %77 : vector<1x256xf32> to vector<8x256xf32>
    %79 = arith.mulf %76, %78 : vector<8x256xf32>
    %c48_84 = arith.constant 48 : index
    %c0_85 = arith.constant 0 : index
    %80 = vector.load %arg9[%c48_84, %c0_85] : memref<72x256xf32, #tpu.memory_space<vmem>>, vector<8x256xf32>
    tpu.vector_store %arg9[%c48_84, %c0_85], %79 {strides = array<i32>} : memref<72x256xf32, #tpu.memory_space<vmem>>, vector<8x256xf32>,
    %c0_86 = arith.constant 0 : index
    %c144_87 = arith.constant 144 : index
    %81 = vector.load %arg8[%c0_86, %c144_87] : memref<8x512xf32, #tpu.memory_space<vmem>>, vector<8x256xf32>
    %c56_88 = arith.constant 56 : index
    %c0_89 = arith.constant 0 : index
    %82 = vector.load %arg9[%c56_88, %c0_89] : memref<72x256xf32, #tpu.memory_space<vmem>>, vector<8x256xf32>
    tpu.vector_store %arg9[%c56_88, %c0_89], %81 {strides = array<i32>} : memref<72x256xf32, #tpu.memory_space<vmem>>, vector<8x256xf32>,
    %c0_90 = arith.constant 0 : index
    %c145_91 = arith.constant 145 : index
    %83 = vector.load %arg8[%c0_90, %c145_91] : memref<8x512xf32, #tpu.memory_space<vmem>>, vector<8x256xf32>
    %c1_92 = arith.constant 1 : index
    %c0_93 = arith.constant 0 : index
    %84 = vector.load %arg2[%c1_92, %c0_93] : memref<2x256xf32, #tpu.memory_space<vmem>>, vector<1x256xf32>
    %85 = vector.broadcast %84 : vector<1x256xf32> to vector<8x256xf32>
    %86 = arith.mulf %83, %85 : vector<8x256xf32>
    %c64_94 = arith.constant 64 : index
    %c0_95 = arith.constant 0 : index
    %87 = vector.load %arg9[%c64_94, %c0_95] : memref<72x256xf32, #tpu.memory_space<vmem>>, vector<8x256xf32>
    tpu.vector_store %arg9[%c64_94, %c0_95], %86 {strides = array<i32>} : memref<72x256xf32, #tpu.memory_space<vmem>>, vector<8x256xf32>,
    %c0_96 = arith.constant 0 : index
    %c0_97 = arith.constant 0 : index
    %88 = vector.load %arg5[%c0_96, %c0_97] : memref<8x72xf32, #tpu.memory_space<vmem>>, vector<8x72xf32>
    %c0_98 = arith.constant 0 : index
    %c0_99 = arith.constant 0 : index
    %89 = vector.load %arg9[%c0_98, %c0_99] : memref<72x256xf32, #tpu.memory_space<vmem>>, vector<72x256xf32>
    %cst_100 = arith.constant dense<0.000000e+00> : vector<8x256xf32>
    %90 = tpu.matmul %88, %89, %cst_100 {dimension_numbers = #tpu.dot_dimension_numbers<[1], [0], [0], [1], [0, 0, 1, 1], [], []>} : vector<8x72xf32>, vector<72x256xf32>, vector<8x256xf32> -> vector<8x256xf32>
    %c0_101 = arith.constant 0 : index
    %c0_102 = arith.constant 0 : index
    %91 = vector.load %arg6[%c0_101, %c0_102] : memref<8x1xf32, #tpu.memory_space<vmem>>, vector<8x1xf32>
    %92 = vector.broadcast %91 : vector<8x1xf32> to vector<8x256xf32>
    %93 = arith.addf %90, %92 : vector<8x256xf32>
    %c0_103 = arith.constant 0 : index
    %c0_104 = arith.constant 0 : index
    %c0_105 = arith.constant 0 : index
    %94 = vector.load %arg1[%c0_103, %c0_104, %c0_105] : memref<1x8x256xf32, #tpu.memory_space<vmem>>, vector<1x8x256xf32>
    %95 = vector.shape_cast %94 : vector<1x8x256xf32> to vector<8x256xf32>
    %96 = arith.addf %93, %95 : vector<8x256xf32>
    %cst_106 = arith.constant 0.000000e+00 : f32
    %97 = vector.broadcast %cst_106 : f32 to vector<8x256xf32>
    %98 = arith.maximumf %96, %97 : vector<8x256xf32>
    %c0_107 = arith.constant 0 : index
    %c0_108 = arith.constant 0 : index
    %c0_109 = arith.constant 0 : index
    %99 = vector.load %arg7[%c0_107, %c0_108, %c0_109] : memref<1x8x256xf32, #tpu.memory_space<vmem>>, vector<1x8x256xf32>
    %100 = vector.shape_cast %99 : vector<1x8x256xf32> to vector<8x256xf32>
    %101 = vector.shape_cast %98 : vector<8x256xf32> to vector<1x8x256xf32>
    tpu.vector_store %arg7[%c0_107, %c0_108, %c0_109], %101 {strides = array<i32>} : memref<1x8x256xf32, #tpu.memory_space<vmem>>, vector<1x8x256xf32>,
    return
  }
  func.func @transform_0(%arg0: i32) -> (i32, i32, i32) {
    %c0_i32 = arith.constant 0 : i32
    %c0_i32_0 = arith.constant 0 : i32
    %c0_i32_1 = arith.constant 0 : i32
    return %arg0, %c0_i32, %c0_i32_0 : i32, i32, i32
  }
  func.func @transform_1(%arg0: i32) -> (i32, i32) {
    %c0_i32 = arith.constant 0 : i32
    %c0_i32_0 = arith.constant 0 : i32
    %c0_i32_1 = arith.constant 0 : i32
    return %c0_i32, %c0_i32_0 : i32, i32
  }
  func.func @transform_2(%arg0: i32) -> (i32, i32) {
    %c0_i32 = arith.constant 0 : i32
    %c0_i32_0 = arith.constant 0 : i32
    %c0_i32_1 = arith.constant 0 : i32
    return %c0_i32, %c0_i32_0 : i32, i32
  }
  func.func @transform_3(%arg0: i32) -> (i32, i32) {
    %c0_i32 = arith.constant 0 : i32
    %c0_i32_0 = arith.constant 0 : i32
    %c0_i32_1 = arith.constant 0 : i32
    return %c0_i32, %c0_i32_0 : i32, i32
  }
  func.func @transform_4(%arg0: i32) -> (i32, i32) {
    %c0_i32 = arith.constant 0 : i32
    %c0_i32_0 = arith.constant 0 : i32
    %c0_i32_1 = arith.constant 0 : i32
    return %c0_i32, %c0_i32_0 : i32, i32
  }
  func.func @transform_5(%arg0: i32) -> (i32, i32) {
    %c0_i32 = arith.constant 0 : i32
    %c0_i32_0 = arith.constant 0 : i32
    %c0_i32_1 = arith.constant 0 : i32
    return %c0_i32, %c0_i32_0 : i32, i32
  }
  func.func @transform_6(%arg0: i32) -> (i32, i32, i32) {
    %c0_i32 = arith.constant 0 : i32
    %c0_i32_0 = arith.constant 0 : i32
    %c0_i32_1 = arith.constant 0 : i32
    return %arg0, %c0_i32, %c0_i32_0 : i32, i32, i32
  }
}

</mosaic_0001>

<llo_original>
// kernel: tpu_custom_call.1
$region0: #{tpu_custom_call.1}
  #allocation0 [shape = 'u32[]', space=smem, size = 0x4, offset = 0x4, fixed_abs, tag = 'smem constant byte address 0x4 - core index']
  #allocation1 [shape = 'u32[144,128]{1,0:T(1,128)}', space=vmem, size = 0x12000, scoped, tag = 'internal scratch']
  #allocation2 [shape = 'f32[8,512]{1,0:T(8,128)}', space=vmem, size = 0x4000, scoped, tag = 'scratch operand']
  #allocation3 [shape = 'f32[72,256]{1,0:T(8,128)}', space=vmem, size = 0x12000, scoped, tag = 'scratch operand']
  %s0 = inlined_call_operand.hbm [shape: f32[2,8,256], index: 0, kind: input, shape index: {}]
  %s1 = inlined_call_operand.hbm [shape: f32[2,256], index: 1, kind: input, shape index: {}]
  %s2 = inlined_call_operand.vmem [shape: f32[8,72], index: 2, kind: input, shape index: {}]
  %s3 = inlined_call_operand.vmem [shape: f32[8,1], index: 3, kind: input, shape index: {}]
  %s4 = inlined_call_operand.vmem [shape: f32[8,72], index: 4, kind: input, shape index: {}]
  %s5 = inlined_call_operand.vmem [shape: f32[8,1], index: 5, kind: input, shape index: {}]
  %s6 = inlined_call_operand.hbm [shape: f32[2,8,256], index: 6, kind: output, shape index: {}]
  %s7 = sld [smem:[#allocation0]]
  $region65: #{tpu_custom_call.1} parent=0
    _
  %s9 = ssub.s32 1, %s7
  %s10 = scalar_select 0, %s9, %s7
  $region1: #{tpu_custom_call.1} parent=0
    #allocation4 [shape = 'u8[16384]{0}', space=vmem, size = 0x4000, scoped, tag = 'input window, operand 0']
    #allocation5 [shape = 's32[2]{0}', space=sflag, size = 0x8, scoped, tag = 'scoped memory for tpu_custom_call.1']
    #allocation6 [shape = 's32[2]{0}', space=sflag, size = 0x8, scoped, tag = 'scoped memory for tpu_custom_call.1']
    #allocation7 [shape = 'u8[2048]{0}', space=vmem, size = 0x800, scoped, tag = 'input window, operand 1, single buffered']
    #allocation8 [shape = 's32[1]{0}', space=sflag, size = 0x4, scoped, tag = 'scoped memory for tpu_custom_call.1']
    #allocation9 [shape = 'u8[16384]{0}', space=vmem, size = 0x4000, scoped, tag = 'output window, operand 0']
    %11 = vsyncpa [#allocation5], 0
    %s12 = scalar_lea.sflag [#allocation5], 1
    %13 = vsyncpa %s12, 0
    %14 = vsyncpa [#allocation8], 0
    %15 = vsyncpa [#allocation6], 0
    %s16 = scalar_lea.sflag [#allocation6], 1
    %17 = vsyncpa %s16, 0
    loop: start=0, step=1, limit=4
    $region2: #{tpu_custom_call.1} parent=1 // loop_pre_header
      _
    $region3: #{tpu_custom_call.1} parent=1 // loop_header
      %s19 = sphi 0, %s23
      %p20 = scmp.ge.s32.totalorder %s19, 4
      %s29 = sphi 0, %s31
      %s32 = sphi 0, %s29
      %s33 = sphi 0, %s32
      %s49 = sphi 0, %s33
      %s53 = sphi 0, %s53
      %s55 = sphi 0, %s53
      %s56 = sphi 0, %s55
      %s70 = sphi 0, %s56
      %s74 = sphi 0, %s74
      %s76 = sphi 0, %s74
      %s77 = sphi 0, %s76
      %s91 = sphi 0, %s77
      %s95 = sphi 0, %s95
      %s97 = sphi 0, %s95
      %s98 = sphi 0, %s97
      %s112 = sphi 0, %s98
      %s116 = sphi 0, %s116
      %s118 = sphi 0, %s116
      %s119 = sphi 0, %s118
      %s133 = sphi 0, %s119
      %s137 = sphi 0, %s137
      %s139 = sphi 0, %s137
      %s140 = sphi 0, %s139
      %s154 = sphi 0, %s140
      %s160 = sphi 0, %s162
      %s163 = sphi 0, %s160
      %s164 = sphi 0, %s163
      %s180 = sphi 0, %s164
    $region4: #{tpu_custom_call.1} parent=1 // loop_header_branch
      %22 = sbr.rel (%p20) target = $region8
    $region5: #{tpu_custom_call.1} parent=1 // loop_body
      %s24 = ssub.s32 %s19, 1
      %s25 = ssub.s32 %s19, 2
      %s26 = sadd.s32 %s19, 1
      %s27 = ssub.s32 %s19, %s26
      %p28 = scmp.eq.s32.totalorder %s27, 0
      %s30 = sadd.s32 %s29, 1
      %s31 = scalar_select %p28, %s29, %s30
      %p34 = pneg %p28
      %p35 = scmp.eq.s32.totalorder %s19, 1
      %p36 = por %p34, %p35
      %p37 = scmp.ne.s32.totalorder %s29, %s32
      %p38 = scmp.eq.s32.totalorder %s19, 0
      %p39 = por %p37, %p38
      %p40 = scmp.ne.s32.totalorder %s29, %s32
      %p41 = scmp.eq.s32.totalorder %s24, 1
      %p42 = por %p40, %p41
      %p43 = scmp.ne.s32.totalorder %s32, %s33
      %p44 = scmp.eq.s32.totalorder %s24, 0
      %p45 = por %p43, %p44
      %p46 = scmp.ne.s32.totalorder %s32, %s33
      %p47 = scmp.eq.s32.totalorder %s25, 1
      %p48 = por %p46, %p47
      %p50 = scmp.ne.s32.totalorder %s33, %s49
      %p51 = scmp.eq.s32.totalorder %s25, 0
      %p52 = por %p50, %p51
      %s54 = sadd.s32 %s53, 1
      %p57 = scmp.eq.s32.totalorder %s19, 1
      %p58 = scmp.ne.s32.totalorder %s53, %s55
      %p59 = scmp.eq.s32.totalorder %s19, 0
      %p60 = por %p58, %p59
      %p61 = scmp.ne.s32.totalorder %s53, %s55
      %p62 = scmp.eq.s32.totalorder %s24, 1
      %p63 = por %p61, %p62
      %p64 = scmp.ne.s32.totalorder %s55, %s56
      %p65 = scmp.eq.s32.totalorder %s24, 0
      %p66 = por %p64, %p65
      %p67 = scmp.ne.s32.totalorder %s55, %s56
      %p68 = scmp.eq.s32.totalorder %s25, 1
      %p69 = por %p67, %p68
      %p71 = scmp.ne.s32.totalorder %s56, %s70
      %p72 = scmp.eq.s32.totalorder %s25, 0
      %p73 = por %p71, %p72
      %s75 = sadd.s32 %s74, 1
      %p78 = scmp.eq.s32.totalorder %s19, 1
      %p79 = scmp.ne.s32.totalorder %s74, %s76
      %p80 = scmp.eq.s32.totalorder %s19, 0
      %p81 = por %p79, %p80
      %p82 = scmp.ne.s32.totalorder %s74, %s76
      %p83 = scmp.eq.s32.totalorder %s24, 1
      %p84 = por %p82, %p83
      %p85 = scmp.ne.s32.totalorder %s76, %s77
      %p86 = scmp.eq.s32.totalorder %s24, 0
      %p87 = por %p85, %p86
      %p88 = scmp.ne.s32.totalorder %s76, %s77
      %p89 = scmp.eq.s32.totalorder %s25, 1
      %p90 = por %p88, %p89
      %p92 = scmp.ne.s32.totalorder %s77, %s91
      %p93 = scmp.eq.s32.totalorder %s25, 0
      %p94 = por %p92, %p93
      %s96 = sadd.s32 %s95, 1
      %p99 = scmp.eq.s32.totalorder %s19, 1
      %p100 = scmp.ne.s32.totalorder %s95, %s97
      %p101 = scmp.eq.s32.totalorder %s19, 0
      %p102 = por %p100, %p101
      %p103 = scmp.ne.s32.totalorder %s95, %s97
      %p104 = scmp.eq.s32.totalorder %s24, 1
      %p105 = por %p103, %p104
      %p106 = scmp.ne.s32.totalorder %s97, %s98
      %p107 = scmp.eq.s32.totalorder %s24, 0
      %p108 = por %p106, %p107
      %p109 = scmp.ne.s32.totalorder %s97, %s98
      %p110 = scmp.eq.s32.totalorder %s25, 1
      %p111 = por %p109, %p110
      %p113 = scmp.ne.s32.totalorder %s98, %s112
      %p114 = scmp.eq.s32.totalorder %s25, 0
      %p115 = por %p113, %p114
      %s117 = sadd.s32 %s116, 1
      %p120 = scmp.eq.s32.totalorder %s19, 1
      %p121 = scmp.ne.s32.totalorder %s116, %s118
      %p122 = scmp.eq.s32.totalorder %s19, 0
      %p123 = por %p121, %p122
      %p124 = scmp.ne.s32.totalorder %s116, %s118
      %p125 = scmp.eq.s32.totalorder %s24, 1
      %p126 = por %p124, %p125
      %p127 = scmp.ne.s32.totalorder %s118, %s119
      %p128 = scmp.eq.s32.totalorder %s24, 0
      %p129 = por %p127, %p128
      %p130 = scmp.ne.s32.totalorder %s118, %s119
      %p131 = scmp.eq.s32.totalorder %s25, 1
      %p132 = por %p130, %p131
      %p134 = scmp.ne.s32.totalorder %s119, %s133
      %p135 = scmp.eq.s32.totalorder %s25, 0
      %p136 = por %p134, %p135
      %s138 = sadd.s32 %s137, 1
      %p141 = scmp.eq.s32.totalorder %s19, 1
      %p142 = scmp.ne.s32.totalorder %s137, %s139
      %p143 = scmp.eq.s32.totalorder %s19, 0
      %p144 = por %p142, %p143
      %p145 = scmp.ne.s32.totalorder %s137, %s139
      %p146 = scmp.eq.s32.totalorder %s24, 1
      %p147 = por %p145, %p146
      %p148 = scmp.ne.s32.totalorder %s139, %s140
      %p149 = scmp.eq.s32.totalorder %s24, 0
      %p150 = por %p148, %p149
      %p151 = scmp.ne.s32.totalorder %s139, %s140
      %p152 = scmp.eq.s32.totalorder %s25, 1
      %p153 = por %p151, %p152
      %p155 = scmp.ne.s32.totalorder %s140, %s154
      %p156 = scmp.eq.s32.totalorder %s25, 0
      %p157 = por %p155, %p156
      %s158 = ssub.s32 %s19, %s26
      %p159 = scmp.eq.s32.totalorder %s158, 0
      %s161 = sadd.s32 %s160, 1
      %s162 = scalar_select %p159, %s160, %s161
      %p165 = pneg %p159
      %p166 = scmp.eq.s32.totalorder %s19, 1
      %p167 = por %p165, %p166
      %p168 = scmp.ne.s32.totalorder %s160, %s163
      %p169 = scmp.eq.s32.totalorder %s19, 0
      %p170 = por %p168, %p169
      %p171 = scmp.ne.s32.totalorder %s160, %s163
      %p172 = scmp.eq.s32.totalorder %s24, 1
      %p173 = por %p171, %p172
      %p174 = scmp.ne.s32.totalorder %s163, %s164
      %p175 = scmp.eq.s32.totalorder %s24, 0
      %p176 = por %p174, %p175
      %p177 = scmp.ne.s32.totalorder %s163, %s164
      %p178 = scmp.eq.s32.totalorder %s25, 1
      %p179 = por %p177, %p178
      %p181 = scmp.ne.s32.totalorder %s164, %s180
      %p182 = scmp.eq.s32.totalorder %s25, 0
      %p183 = por %p181, %p182
      %p184 = scmp.le.s32.totalorder 1, %s19
      %p185 = scmp.lt.s32.totalorder %s19, 3
      %p186 = pnand %p184, %p185
      %p187 = pneg %p186
      // Predicated region
      $region9: #{tpu_custom_call.1} parent=5 // pred_check
        _
      $region10: #{tpu_custom_call.1} parent=5 // pred_check_branch
        %189 = sbr.rel (%p186) target = $region12
      $region11: #{tpu_custom_call.1} parent=5 // pred_region
        %s190 = ssub.s32 %s19, 1
        // Predicated region
        $region13: #{tpu_custom_call.1} parent=11 // pred_check
          %p191 = pneg %p66
        $region14: #{tpu_custom_call.1} parent=11 // pred_check_branch
          %193 = sbr.rel (%p191) target = $region16
        $region15: #{tpu_custom_call.1} parent=11 // pred_region
          %s195 = ssub.s32 64, 64
          %196 = vsyncadd [#allocation8], %s195
          %s198 = sshll.u32 [#allocation7], 4
          %s199 = int_to_ptr.vmem [resolvable:$true] %s198
          %201 = dma.hbm_to_vmem [thread:$0]  %s1, 64, %s199, [#allocation8]
        $region16: #{tpu_custom_call.1} parent=11 // pred_fallthru
          _
        // Predicated region
        $region17: #{tpu_custom_call.1} parent=11 // pred_check
          %p202 = pneg %p87
        $region18: #{tpu_custom_call.1} parent=11 // pred_check_branch
          %204 = sbr.rel (%p202) target = $region20
        $region19: #{tpu_custom_call.1} parent=11 // pred_region
          _
        $region20: #{tpu_custom_call.1} parent=11 // pred_fallthru
          _
        // Predicated region
        $region21: #{tpu_custom_call.1} parent=11 // pred_check
          %p205 = pneg %p108
        $region22: #{tpu_custom_call.1} parent=11 // pred_check_branch
          %207 = sbr.rel (%p205) target = $region24
        $region23: #{tpu_custom_call.1} parent=11 // pred_region
          _
        $region24: #{tpu_custom_call.1} parent=11 // pred_fallthru
          _
        // Predicated region
        $region25: #{tpu_custom_call.1} parent=11 // pred_check
          %p208 = pneg %p129
        $region26: #{tpu_custom_call.1} parent=11 // pred_check_branch
          %210 = sbr.rel (%p208) target = $region28
        $region27: #{tpu_custom_call.1} parent=11 // pred_region
          _
        $region28: #{tpu_custom_call.1} parent=11 // pred_fallthru
          _
        // Predicated region
        $region29: #{tpu_custom_call.1} parent=11 // pred_check
          %p211 = pneg %p150
        $region30: #{tpu_custom_call.1} parent=11 // pred_check_branch
          %213 = sbr.rel (%p211) target = $region32
        $region31: #{tpu_custom_call.1} parent=11 // pred_region
          _
        $region32: #{tpu_custom_call.1} parent=11 // pred_fallthru
          _
      $region12: #{tpu_custom_call.1} parent=5 // pred_fallthru
        _
      %p214 = scmp.lt.s32.totalorder %s19, 2
      // Predicated region
      $region33: #{tpu_custom_call.1} parent=5 // pred_check
        %p215 = pneg %p214
      $region34: #{tpu_custom_call.1} parent=5 // pred_check_branch
        %217 = sbr.rel (%p215) target = $region36
      $region35: #{tpu_custom_call.1} parent=5 // pred_region
        // Predicated region
        $region37: #{tpu_custom_call.1} parent=35 // pred_check
          %p218 = pneg %p39
        $region38: #{tpu_custom_call.1} parent=35 // pred_check_branch
          %220 = sbr.rel (%p218) target = $region40
        $region39: #{tpu_custom_call.1} parent=35 // pred_region
          %s221 = sand.u32 %s29, 1
          %s222 = scalar_lea.sflag [#allocation5], %s221
          %s223 = sand.u32 %s29, 1
          %s224 = smul.addr %s223, 16
          %s225 = scalar_lea.vmem [#allocation4], %s224
          %s227 = ssub.s32 256, 256
          %228 = vsyncadd %s222, %s227
          %s229 = smul.addr %s19, 2
          %s230 = smul.addr %s229, 128
          %s231 = scalar_lea.hbm %s0, %s230
          %s233 = sshll.u32 %s225, 4
          %s234 = int_to_ptr.vmem [resolvable:$true] %s233
          %236 = dma.hbm_to_vmem [thread:$0]  %s231, 256, %s234, %s222
        $region40: #{tpu_custom_call.1} parent=35 // pred_fallthru
          _
      $region36: #{tpu_custom_call.1} parent=5 // pred_fallthru
        _
      %p237 = scmp.le.s32.totalorder 1, %s19
      %p238 = scmp.lt.s32.totalorder %s19, 3
      %p239 = pnand %p237, %p238
      %p240 = pneg %p239
      // Predicated region
      $region41: #{tpu_custom_call.1} parent=5 // pred_check
        _
      $region42: #{tpu_custom_call.1} parent=5 // pred_check_branch
        %242 = sbr.rel (%p239) target = $region44
      $region43: #{tpu_custom_call.1} parent=5 // pred_region
        %s243 = ssub.s32 %s19, 1
        %s244 = sand.u32 %s32, 1
        %s245 = scalar_lea.sflag [#allocation5], %s244
        %s246 = sand.u32 %s32, 1
        %s247 = smul.addr %s246, 16
        %s248 = scalar_lea.vmem [#allocation4], %s247
        // Predicated region
        $region45: #{tpu_custom_call.1} parent=43 // pred_check
          %p249 = pneg %p45
        $region46: #{tpu_custom_call.1} parent=43 // pred_check_branch
          %251 = sbr.rel (%p249) target = $region48
        $region47: #{tpu_custom_call.1} parent=43 // pred_region
          %252 = dma.done %s245, 256
        $region48: #{tpu_custom_call.1} parent=43 // pred_fallthru
          _
        // Predicated region
        $region49: #{tpu_custom_call.1} parent=43 // pred_check
          %p253 = pneg %p66
        $region50: #{tpu_custom_call.1} parent=43 // pred_check_branch
          %255 = sbr.rel (%p253) target = $region52
        $region51: #{tpu_custom_call.1} parent=43 // pred_region
          %256 = dma.done [#allocation8], 64
        $region52: #{tpu_custom_call.1} parent=43 // pred_fallthru
          _
        %s257 = sand.u32 %s32, 1
        %s258 = scalar_lea.sflag [#allocation5], %s257
        %s259 = sand.u32 %s32, 1
        %s260 = smul.addr %s259, 16
        %s261 = scalar_lea.vmem [#allocation4], %s260
        %p262 = pneg %p45
        %p263 = pneg %p42
        %p264 = pneg %p66
        %p265 = pneg %p63
        %p266 = pneg %p87
        %p267 = pneg %p84
        %p268 = pneg %p108
        %p269 = pneg %p105
        %p270 = pneg %p129
        %p271 = pneg %p126
        %p272 = pneg %p150
        %p273 = pneg %p147
        %p274 = pneg %p176
        %p275 = pneg %p173
        %s276 = sand.u32 %s163, 1
        %s277 = scalar_lea.sflag [#allocation6], %s276
        %s278 = sand.u32 %s163, 1
        %s279 = smul.addr %s278, 16
        %s280 = scalar_lea.vmem [#allocation9], %s279
        %281 = vst [vmem:[#allocation2] sm:$0xff] 0.0
        %282 = vst [vmem:[#allocation2 + $0x18] sm:$0xff] 0.0
        %v283 = vld [vmem:[%s248] sm:$0xff]
        %v284 = vld [vmem:[%s248 + $0x8] sm:$0xff]
        %285 = vst [vmem:[#allocation2 + $0x8] sm:$0xff] %v283
        %286 = vst [vmem:[#allocation2 + $0x10] sm:$0xff] %v284
        %v287 = vld [vmem:[#allocation2] sm:$0xff]
        %v288 = vld [vmem:[#allocation2 + $0x8] sm:$0xff]
        %v289 = vld [vmem:[#allocation2 + $0x10] sm:$0xff]
        %v290 = vld [vmem:[#allocation7] ss:$2 sm:$0x3]
        %v292 = vlaneseq
        %v293 = vshrl.u32 %v292, 7
        %v294 = vsub.s32 0, %v293
        %v295 = vrot.slane %v290, %v294
        %v296 = vlaneseq
        %v297 = vshrl.u32 %v296, 7
        %v298 = vsub.s32 1, %v297
        %v299 = vrot.slane %v290, %v298
        %300 = vrot.lane.b32.xlu0 %v295, 111
        %v301 = vpop.permute.xlu0 %300
        %302 = vrot.lane.b32.xlu0 %v299, 111
        %v303 = vpop.permute.xlu0 %302
        %vm304 = vcmask 908288
        %v305 = vsel %vm304, %v301, %v303
        %v309 = vmul.f32 %v287, %v301
        %v310 = vmul.f32 %v288, %v305
        %v311 = vmul.f32 %v289, %v303
        %315 = vrot.lane.b32.xlu0 %v309, 17
        %v316 = vpop.permute.xlu0 %315
        %317 = vrot.lane.b32.xlu0 %v310, 17
        %v318 = vpop.permute.xlu0 %317
        %319 = vrot.lane.b32.xlu0 %v311, 17
        %v320 = vpop.permute.xlu0 %319
        %vm321 = vcmask 138240
        %v322 = vsel %vm321, %v316, %v318
        %v323 = vsel %vm321, %v318, %v320
        %326 = vst [vmem:[#allocation3] sm:$0xff] %v322
        %327 = vst [vmem:[#allocation3 + $0x8] sm:$0xff] %v323
        %v328 = vld [vmem:[#allocation2] sm:$0xff]
        %v329 = vld [vmem:[#allocation2 + $0x8] sm:$0xff]
        %v330 = vld [vmem:[#allocation2 + $0x10] sm:$0xff]
        %334 = vrot.lane.b32.xlu0 %v328, 16
        %v335 = vpop.permute.xlu0 %334
        %336 = vrot.lane.b32.xlu0 %v329, 16
        %v337 = vpop.permute.xlu0 %336
        %338 = vrot.lane.b32.xlu0 %v330, 16
        %v339 = vpop.permute.xlu0 %338
        %vm340 = vcmask 130048
        %v341 = vsel %vm340, %v335, %v337
        %v342 = vsel %vm340, %v337, %v339
        %345 = vst [vmem:[#allocation3 + $0x10] sm:$0xff] %v341
        %346 = vst [vmem:[#allocation3 + $0x18] sm:$0xff] %v342
        %v347 = vld [vmem:[#allocation2] sm:$0xff]
        %v348 = vld [vmem:[#allocation2 + $0x8] sm:$0xff]
        %v349 = vld [vmem:[#allocation2 + $0x10] sm:$0xff]
        %s350 = scalar_lea.vmem [#allocation7], 1
        %v351 = vld [vmem:[%s350] ss:$2 sm:$0x3]
        %v353 = vlaneseq
        %v354 = vshrl.u32 %v353, 7
        %v355 = vsub.s32 0, %v354
        %v356 = vrot.slane %v351, %v355
        %v357 = vlaneseq
        %v358 = vshrl.u32 %v357, 7
        %v359 = vsub.s32 1, %v358
        %v360 = vrot.slane %v351, %v359
        %361 = vrot.lane.b32.xlu0 %v356, 113
        %v362 = vpop.permute.xlu0 %361
        %363 = vrot.lane.b32.xlu0 %v360, 113
        %v364 = vpop.permute.xlu0 %363
        %vm365 = vcmask 924672
        %v366 = vsel %vm365, %v362, %v364
        %v370 = vmul.f32 %v347, %v362
        %v371 = vmul.f32 %v348, %v366
        %v372 = vmul.f32 %v349, %v364
        %376 = vrot.lane.b32.xlu0 %v370, 15
        %v377 = vpop.permute.xlu0 %376
        %378 = vrot.lane.b32.xlu0 %v371, 15
        %v379 = vpop.permute.xlu0 %378
        %380 = vrot.lane.b32.xlu0 %v372, 15
        %v381 = vpop.permute.xlu0 %380
        %vm382 = vcmask 121856
        %v383 = vsel %vm382, %v377, %v379
        %v384 = vsel %vm382, %v379, %v381
        %387 = vst [vmem:[#allocation3 + $0x20] sm:$0xff] %v383
        %388 = vst [vmem:[#allocation3 + $0x28] sm:$0xff] %v384
        %v389 = vld [vmem:[#allocation2] sm:$0xff]
        %v390 = vld [vmem:[#allocation2 + $0x8] sm:$0xff]
        %v391 = vld [vmem:[#allocation2 + $0x10] sm:$0xff]
        %v392 = vld [vmem:[#allocation7] ss:$2 sm:$0x3]
        %v394 = vlaneseq
        %v395 = vshrl.u32 %v394, 7
        %v396 = vsub.s32 0, %v395
        %v397 = vrot.slane %v392, %v396
        %v398 = vlaneseq
        %v399 = vshrl.u32 %v398, 7
        %v400 = vsub.s32 1, %v399
        %v401 = vrot.slane %v392, %v400
        %402 = vrot.lane.b32.xlu0 %v397, 127
        %v403 = vpop.permute.xlu0 %402
        %404 = vrot.lane.b32.xlu0 %v401, 127
        %v405 = vpop.permute.xlu0 %404
        %vm406 = vcmask 1039360
        %v407 = vsel %vm406, %v403, %v405
        %v411 = vmul.f32 %v389, %v403
        %v412 = vmul.f32 %v390, %v407
        %v413 = vmul.f32 %v391, %v405
        %417 = vrot.lane.b32.xlu0 %v411, 1
        %v418 = vpop.permute.xlu0 %417
        %419 = vrot.lane.b32.xlu0 %v412, 1
        %v420 = vpop.permute.xlu0 %419
        %421 = vrot.lane.b32.xlu0 %v413, 1
        %v422 = vpop.permute.xlu0 %421
        %vm423 = vcmask 7168
        %v424 = vsel %vm423, %v418, %v420
        %v425 = vsel %vm423, %v420, %v422
        %428 = vst [vmem:[#allocation3 + $0x30] sm:$0xff] %v424
        %429 = vst [vmem:[#allocation3 + $0x38] sm:$0xff] %v425
        %v430 = vld [vmem:[#allocation2 + $0x8] sm:$0xff]
        %v431 = vld [vmem:[#allocation2 + $0x10] sm:$0xff]
        %432 = vst [vmem:[#allocation3 + $0x40] sm:$0xff] %v430
        %433 = vst [vmem:[#allocation3 + $0x48] sm:$0xff] %v431
        %v434 = vld [vmem:[#allocation2 + $0x8] sm:$0xff]
        %v435 = vld [vmem:[#allocation2 + $0x10] sm:$0xff]
        %v436 = vld [vmem:[#allocation2 + $0x18] sm:$0xff]
        %v437 = vld [vmem:[%s350] ss:$2 sm:$0x3]
        %v439 = vlaneseq
        %v440 = vshrl.u32 %v439, 7
        %v441 = vsub.s32 0, %v440
        %v442 = vrot.slane %v437, %v441
        %v443 = vlaneseq
        %v444 = vshrl.u32 %v443, 7
        %v445 = vsub.s32 1, %v444
        %v446 = vrot.slane %v437, %v445
        %447 = vrot.lane.b32.xlu0 %v442, 1
        %v448 = vpop.permute.xlu0 %447
        %449 = vrot.lane.b32.xlu0 %v446, 1
        %v450 = vpop.permute.xlu0 %449
        %v451 = vsel %vm423, %v448, %v450
        %v455 = vmul.f32 %v434, %v448
        %v456 = vmul.f32 %v435, %v451
        %v457 = vmul.f32 %v436, %v450
        %461 = vrot.lane.b32.xlu0 %v455, 127
        %v462 = vpop.permute.xlu0 %461
        %463 = vrot.lane.b32.xlu0 %v456, 127
        %v464 = vpop.permute.xlu0 %463
        %465 = vrot.lane.b32.xlu0 %v457, 127
        %v466 = vpop.permute.xlu0 %465
        %v467 = vsel %vm406, %v462, %v464
        %v468 = vsel %vm406, %v464, %v466
        %471 = vst [vmem:[#allocation3 + $0x50] sm:$0xff] %v467
        %472 = vst [vmem:[#allocation3 + $0x58] sm:$0xff] %v468
        %v473 = vld [vmem:[#allocation2 + $0x8] sm:$0xff]
        %v474 = vld [vmem:[#allocation2 + $0x10] sm:$0xff]
        %v475 = vld [vmem:[#allocation2 + $0x18] sm:$0xff]
        %v476 = vld [vmem:[#allocation7] ss:$2 sm:$0x3]
        %v478 = vlaneseq
        %v479 = vshrl.u32 %v478, 7
        %v480 = vsub.s32 0, %v479
        %v481 = vrot.slane %v476, %v480
        %v482 = vlaneseq
        %v483 = vshrl.u32 %v482, 7
        %v484 = vsub.s32 1, %v483
        %v485 = vrot.slane %v476, %v484
        %486 = vrot.lane.b32.xlu0 %v481, 15
        %v487 = vpop.permute.xlu0 %486
        %488 = vrot.lane.b32.xlu0 %v485, 15
        %v489 = vpop.permute.xlu0 %488
        %v490 = vsel %vm382, %v487, %v489
        %v494 = vmul.f32 %v473, %v487
        %v495 = vmul.f32 %v474, %v490
        %v496 = vmul.f32 %v475, %v489
        %500 = vrot.lane.b32.xlu0 %v494, 113
        %v501 = vpop.permute.xlu0 %500
        %502 = vrot.lane.b32.xlu0 %v495, 113
        %v503 = vpop.permute.xlu0 %502
        %504 = vrot.lane.b32.xlu0 %v496, 113
        %v505 = vpop.permute.xlu0 %504
        %v506 = vsel %vm365, %v501, %v503
        %v507 = vsel %vm365, %v503, %v505
        %510 = vst [vmem:[#allocation3 + $0x60] sm:$0xff] %v506
        %511 = vst [vmem:[#allocation3 + $0x68] sm:$0xff] %v507
        %v512 = vld [vmem:[#allocation2 + $0x8] sm:$0xff]
        %v513 = vld [vmem:[#allocation2 + $0x10] sm:$0xff]
        %v514 = vld [vmem:[#allocation2 + $0x18] sm:$0xff]
        %518 = vrot.lane.b32.xlu0 %v512, 112
        %v519 = vpop.permute.xlu0 %518
        %520 = vrot.lane.b32.xlu0 %v513, 112
        %v521 = vpop.permute.xlu0 %520
        %522 = vrot.lane.b32.xlu0 %v514, 112
        %v523 = vpop.permute.xlu0 %522
        %vm524 = vcmask 916480
        %v525 = vsel %vm524, %v519, %v521
        %v526 = vsel %vm524, %v521, %v523
        %529 = vst [vmem:[#allocation3 + $0x70] sm:$0xff] %v525
        %530 = vst [vmem:[#allocation3 + $0x78] sm:$0xff] %v526
        %v531 = vld [vmem:[#allocation2 + $0x8] sm:$0xff]
        %v532 = vld [vmem:[#allocation2 + $0x10] sm:$0xff]
        %v533 = vld [vmem:[#allocation2 + $0x18] sm:$0xff]
        %v534 = vld [vmem:[%s350] ss:$2 sm:$0x3]
        %v536 = vlaneseq
        %v537 = vshrl.u32 %v536, 7
        %v538 = vsub.s32 0, %v537
        %v539 = vrot.slane %v534, %v538
        %v540 = vlaneseq
        %v541 = vshrl.u32 %v540, 7
        %v542 = vsub.s32 1, %v541
        %v543 = vrot.slane %v534, %v542
        %544 = vrot.lane.b32.xlu0 %v539, 17
        %v545 = vpop.permute.xlu0 %544
        %546 = vrot.lane.b32.xlu0 %v543, 17
        %v547 = vpop.permute.xlu0 %546
        %v548 = vsel %vm321, %v545, %v547
        %v552 = vmul.f32 %v531, %v545
        %v553 = vmul.f32 %v532, %v548
        %v554 = vmul.f32 %v533, %v547
        %558 = vrot.lane.b32.xlu0 %v552, 111
        %v559 = vpop.permute.xlu0 %558
        %560 = vrot.lane.b32.xlu0 %v553, 111
        %v561 = vpop.permute.xlu0 %560
        %562 = vrot.lane.b32.xlu0 %v554, 111
        %v563 = vpop.permute.xlu0 %562
        %v564 = vsel %vm304, %v559, %v561
        %v565 = vsel %vm304, %v561, %v563
        %568 = vst [vmem:[#allocation3 + $0x80] sm:$0xff] %v564
        %569 = vst [vmem:[#allocation3 + $0x88] sm:$0xff] %v565
        %v570 = vld [vmem:[%s2] sm:$0xff]
        %v571 = vld [vmem:[#allocation3] sm:$0xff]
        %v572 = vld [vmem:[#allocation3 + $0x8] sm:$0xff]
        %v573 = vld [vmem:[#allocation3 + $0x10] sm:$0xff]
        %v574 = vld [vmem:[#allocation3 + $0x18] sm:$0xff]
        %v575 = vld [vmem:[#allocation3 + $0x20] sm:$0xff]
        %v576 = vld [vmem:[#allocation3 + $0x28] sm:$0xff]
        %v577 = vld [vmem:[#allocation3 + $0x30] sm:$0xff]
        %v578 = vld [vmem:[#allocation3 + $0x38] sm:$0xff]
        %v579 = vld [vmem:[#allocation3 + $0x40] sm:$0xff]
        %v580 = vld [vmem:[#allocation3 + $0x48] sm:$0xff]
        %v581 = vld [vmem:[#allocation3 + $0x50] sm:$0xff]
        %v582 = vld [vmem:[#allocation3 + $0x58] sm:$0xff]
        %v583 = vld [vmem:[#allocation3 + $0x60] sm:$0xff]
        %v584 = vld [vmem:[#allocation3 + $0x68] sm:$0xff]
        %v585 = vld [vmem:[#allocation3 + $0x70] sm:$0xff]
        %v586 = vld [vmem:[#allocation3 + $0x78] sm:$0xff]
        %v587 = vld [vmem:[#allocation3 + $0x80] sm:$0xff]
        %v588 = vld [vmem:[#allocation3 + $0x88] sm:$0xff]
        %v589 = vld [vmem:[%s3] sm:$0xff]
        %591 = vset.pattern.permute.xlu0 0
        %592 = vperm.xlu0 %591, %v589
        %v593 = vpop.permute.xlu0 %592
        %vm595 = vcmask 588800
        %v597 = vsel %vm595, %v570, 0
        %599 = vmatprep.subr.mxu0 0.0
        %600 = vmatpush1.msra.mxu0 0.0
        %601 = vmatprep.subr.mxu0 0.0
        %602 = vmatpush1.msra.mxu0 0.0
        %603 = vmatprep.subr.mxu0 0.0
        %604 = vmatpush1.msra.mxu0 0.0
        %605 = vmatprep.subr.mxu0 0.0
        %606 = vmatpush1.msra.mxu0 0.0
        %607 = vmatprep.subr.mxu0 0.0
        %608 = vmatpush1.msra.mxu0 0.0
        %609 = vmatprep.subr.mxu0 0.0
        %610 = vmatpush1.msra.mxu0 0.0
        %611 = vmatprep.subr.mxu0 0.0
        %612 = vmatpush1.msra.mxu0 0.0
        %613 = vmatprep.subr.mxu0 %v588
        %614 = vmatpush1.msra.mxu0 %v587
        %615 = vmatprep.subr.mxu0 %v586
        %616 = vmatpush1.msra.mxu0 %v585
        %617 = vmatprep.subr.mxu0 %v584
        %618 = vmatpush1.msra.mxu0 %v583
        %619 = vmatprep.subr.mxu0 %v582
        %620 = vmatpush1.msra.mxu0 %v581
        %621 = vmatprep.subr.mxu0 %v580
        %622 = vmatpush1.msra.mxu0 %v579
        %623 = vmatprep.subr.mxu0 %v578
        %624 = vmatpush1.msra.mxu0 %v577
        %625 = vmatprep.subr.mxu0 %v576
        %626 = vmatpush1.msra.mxu0 %v575
        %627 = vmatprep.subr.mxu0 %v574
        %628 = vmatpush1.msra.mxu0 %v573
        %629 = vmatprep.subr.mxu0 %v572
        %630 = vmatpush1.msra.mxu0 %v571
        %631 = vmatprep.subr.mxu0 0.0
        %632 = vmatpush2.msra.mxu0 0.0
        %633 = vmatprep.subr.mxu0 0.0
        %634 = vmatpush2.msra.mxu0 0.0
        %635 = vmatprep.subr.mxu0 0.0
        %636 = vmatpush2.msra.mxu0 0.0
        %637 = vmatprep.subr.mxu0 0.0
        %638 = vmatpush2.msra.mxu0 0.0
        %639 = vmatprep.subr.mxu0 0.0
        %640 = vmatpush2.msra.mxu0 0.0
        %641 = vmatprep.subr.mxu0 0.0
        %642 = vmatpush2.msra.mxu0 0.0
        %643 = vmatprep.subr.mxu0 0.0
        %644 = vmatpush2.msra.mxu0 0.0
        %645 = vmatprep.subr.mxu0 0.0
        %646 = vmatpush2.msra.mxu0 0.0
        %647 = vmatprep.subr.mxu0 0.0
        %648 = vmatpush2.msra.mxu0 0.0
        %649 = vmatprep.subr.mxu0 0.0
        %650 = vmatpush2.msra.mxu0 0.0
        %651 = vmatprep.subr.mxu0 0.0
        %652 = vmatpush2.msra.mxu0 0.0
        %653 = vmatprep.subr.mxu0 0.0
        %654 = vmatpush2.msra.mxu0 0.0
        %655 = vmatprep.subr.mxu0 0.0
        %656 = vmatpush2.msra.mxu0 0.0
        %657 = vmatprep.subr.mxu0 0.0
        %658 = vmatpush2.msra.mxu0 0.0
        %659 = vmatprep.subr.mxu0 0.0
        %660 = vmatpush2.msra.mxu0 0.0
        %661 = vmatprep.subr.mxu0 0.0
        %662 = vmatpush2.msra.mxu0 0.0
        %663 = vmatprep.mubr.f32.mxu0 0.0
        %664 = vmatmul.mubr.f32.gmra.mxu0 %v597
        %v665 = vpop.f32.mrf.mxu0
        %v666 = vadd.f32 %v593, %v665
        %v667 = vpop.f32.mrf.mxu0
        %v668 = vadd.f32 %v593, %v667
        %669 = vdwg.mxu0
        %v670 = vmax.f32 %v666, 0.0
        %v671 = vmax.f32 %v668, 0.0
        %672 = vst [vmem:[#allocation2 + $0x8] sm:$0xff] %v670
        %673 = vst [vmem:[#allocation2 + $0x10] sm:$0xff] %v671
        %v674 = vld [vmem:[#allocation2] sm:$0xff]
        %v675 = vld [vmem:[#allocation2 + $0x8] sm:$0xff]
        %v676 = vld [vmem:[#allocation2 + $0x10] sm:$0xff]
        %v677 = vld [vmem:[#allocation7] ss:$2 sm:$0x3]
        %v679 = vlaneseq
        %v680 = vshrl.u32 %v679, 7
        %v681 = vsub.s32 0, %v680
        %v682 = vrot.slane %v677, %v681
        %v683 = vlaneseq
        %v684 = vshrl.u32 %v683, 7
        %v685 = vsub.s32 1, %v684
        %v686 = vrot.slane %v677, %v685
        %687 = vrot.lane.b32.xlu0 %v682, 111
        %v688 = vpop.permute.xlu0 %687
        %689 = vrot.lane.b32.xlu0 %v686, 111
        %v690 = vpop.permute.xlu0 %689
        %v691 = vsel %vm304, %v688, %v690
        %v695 = vmul.f32 %v674, %v688
        %v696 = vmul.f32 %v675, %v691
        %v697 = vmul.f32 %v676, %v690
        %701 = vrot.lane.b32.xlu0 %v695, 17
        %v702 = vpop.permute.xlu0 %701
        %703 = vrot.lane.b32.xlu0 %v696, 17
        %v704 = vpop.permute.xlu0 %703
        %705 = vrot.lane.b32.xlu0 %v697, 17
        %v706 = vpop.permute.xlu0 %705
        %v707 = vsel %vm321, %v702, %v704
        %v708 = vsel %vm321, %v704, %v706
        %711 = vst [vmem:[#allocation3] sm:$0xff] %v707
        %712 = vst [vmem:[#allocation3 + $0x8] sm:$0xff] %v708
        %v713 = vld [vmem:[#allocation2] sm:$0xff]
        %v714 = vld [vmem:[#allocation2 + $0x8] sm:$0xff]
        %v715 = vld [vmem:[#allocation2 + $0x10] sm:$0xff]
        %719 = vrot.lane.b32.xlu0 %v713, 16
        %v720 = vpop.permute.xlu0 %719
        %721 = vrot.lane.b32.xlu0 %v714, 16
        %v722 = vpop.permute.xlu0 %721
        %723 = vrot.lane.b32.xlu0 %v715, 16
        %v724 = vpop.permute.xlu0 %723
        %v725 = vsel %vm340, %v720, %v722
        %v726 = vsel %vm340, %v722, %v724
        %729 = vst [vmem:[#allocation3 + $0x10] sm:$0xff] %v725
        %730 = vst [vmem:[#allocation3 + $0x18] sm:$0xff] %v726
        %v731 = vld [vmem:[#allocation2] sm:$0xff]
        %v732 = vld [vmem:[#allocation2 + $0x8] sm:$0xff]
        %v733 = vld [vmem:[#allocation2 + $0x10] sm:$0xff]
        %v734 = vld [vmem:[%s350] ss:$2 sm:$0x3]
        %v736 = vlaneseq
        %v737 = vshrl.u32 %v736, 7
        %v738 = vsub.s32 0, %v737
        %v739 = vrot.slane %v734, %v738
        %v740 = vlaneseq
        %v741 = vshrl.u32 %v740, 7
        %v742 = vsub.s32 1, %v741
        %v743 = vrot.slane %v734, %v742
        %744 = vrot.lane.b32.xlu0 %v739, 113
        %v745 = vpop.permute.xlu0 %744
        %746 = vrot.lane.b32.xlu0 %v743, 113
        %v747 = vpop.permute.xlu0 %746
        %v748 = vsel %vm365, %v745, %v747
        %v752 = vmul.f32 %v731, %v745
        %v753 = vmul.f32 %v732, %v748
        %v754 = vmul.f32 %v733, %v747
        %758 = vrot.lane.b32.xlu0 %v752, 15
        %v759 = vpop.permute.xlu0 %758
        %760 = vrot.lane.b32.xlu0 %v753, 15
        %v761 = vpop.permute.xlu0 %760
        %762 = vrot.lane.b32.xlu0 %v754, 15
        %v763 = vpop.permute.xlu0 %762
        %v764 = vsel %vm382, %v759, %v761
        %v765 = vsel %vm382, %v761, %v763
        %768 = vst [vmem:[#allocation3 + $0x20] sm:$0xff] %v764
        %769 = vst [vmem:[#allocation3 + $0x28] sm:$0xff] %v765
        %v770 = vld [vmem:[#allocation2] sm:$0xff]
        %v771 = vld [vmem:[#allocation2 + $0x8] sm:$0xff]
        %v772 = vld [vmem:[#allocation2 + $0x10] sm:$0xff]
        %v773 = vld [vmem:[#allocation7] ss:$2 sm:$0x3]
        %v775 = vlaneseq
        %v776 = vshrl.u32 %v775, 7
        %v777 = vsub.s32 0, %v776
        %v778 = vrot.slane %v773, %v777
        %v779 = vlaneseq
        %v780 = vshrl.u32 %v779, 7
        %v781 = vsub.s32 1, %v780
        %v782 = vrot.slane %v773, %v781
        %783 = vrot.lane.b32.xlu0 %v778, 127
        %v784 = vpop.permute.xlu0 %783
        %785 = vrot.lane.b32.xlu0 %v782, 127
        %v786 = vpop.permute.xlu0 %785
        %v787 = vsel %vm406, %v784, %v786
        %v791 = vmul.f32 %v770, %v784
        %v792 = vmul.f32 %v771, %v787
        %v793 = vmul.f32 %v772, %v786
        %797 = vrot.lane.b32.xlu0 %v791, 1
        %v798 = vpop.permute.xlu0 %797
        %799 = vrot.lane.b32.xlu0 %v792, 1
        %v800 = vpop.permute.xlu0 %799
        %801 = vrot.lane.b32.xlu0 %v793, 1
        %v802 = vpop.permute.xlu0 %801
        %v803 = vsel %vm423, %v798, %v800
        %v804 = vsel %vm423, %v800, %v802
        %807 = vst [vmem:[#allocation3 + $0x30] sm:$0xff] %v803
        %808 = vst [vmem:[#allocation3 + $0x38] sm:$0xff] %v804
        %v809 = vld [vmem:[#allocation2 + $0x8] sm:$0xff]
        %v810 = vld [vmem:[#allocation2 + $0x10] sm:$0xff]
        %811 = vst [vmem:[#allocation3 + $0x40] sm:$0xff] %v809
        %812 = vst [vmem:[#allocation3 + $0x48] sm:$0xff] %v810
        %v813 = vld [vmem:[#allocation2 + $0x8] sm:$0xff]
        %v814 = vld [vmem:[#allocation2 + $0x10] sm:$0xff]
        %v815 = vld [vmem:[#allocation2 + $0x18] sm:$0xff]
        %v816 = vld [vmem:[%s350] ss:$2 sm:$0x3]
        %v818 = vlaneseq
        %v819 = vshrl.u32 %v818, 7
        %v820 = vsub.s32 0, %v819
        %v821 = vrot.slane %v816, %v820
        %v822 = vlaneseq
        %v823 = vshrl.u32 %v822, 7
        %v824 = vsub.s32 1, %v823
        %v825 = vrot.slane %v816, %v824
        %826 = vrot.lane.b32.xlu0 %v821, 1
        %v827 = vpop.permute.xlu0 %826
        %828 = vrot.lane.b32.xlu0 %v825, 1
        %v829 = vpop.permute.xlu0 %828
        %v830 = vsel %vm423, %v827, %v829
        %v834 = vmul.f32 %v813, %v827
        %v835 = vmul.f32 %v814, %v830
        %v836 = vmul.f32 %v815, %v829
        %840 = vrot.lane.b32.xlu0 %v834, 127
        %v841 = vpop.permute.xlu0 %840
        %842 = vrot.lane.b32.xlu0 %v835, 127
        %v843 = vpop.permute.xlu0 %842
        %844 = vrot.lane.b32.xlu0 %v836, 127
        %v845 = vpop.permute.xlu0 %844
        %v846 = vsel %vm406, %v841, %v843
        %v847 = vsel %vm406, %v843, %v845
        %850 = vst [vmem:[#allocation3 + $0x50] sm:$0xff] %v846
        %851 = vst [vmem:[#allocation3 + $0x58] sm:$0xff] %v847
        %v852 = vld [vmem:[#allocation2 + $0x8] sm:$0xff]
        %v853 = vld [vmem:[#allocation2 + $0x10] sm:$0xff]
        %v854 = vld [vmem:[#allocation2 + $0x18] sm:$0xff]
        %v855 = vld [vmem:[#allocation7] ss:$2 sm:$0x3]
        %v857 = vlaneseq
        %v858 = vshrl.u32 %v857, 7
        %v859 = vsub.s32 0, %v858
        %v860 = vrot.slane %v855, %v859
        %v861 = vlaneseq
        %v862 = vshrl.u32 %v861, 7
        %v863 = vsub.s32 1, %v862
        %v864 = vrot.slane %v855, %v863
        %865 = vrot.lane.b32.xlu0 %v860, 15
        %v866 = vpop.permute.xlu0 %865
        %867 = vrot.lane.b32.xlu0 %v864, 15
        %v868 = vpop.permute.xlu0 %867
        %v869 = vsel %vm382, %v866, %v868
        %v873 = vmul.f32 %v852, %v866
        %v874 = vmul.f32 %v853, %v869
        %v875 = vmul.f32 %v854, %v868
        %879 = vrot.lane.b32.xlu0 %v873, 113
        %v880 = vpop.permute.xlu0 %879
        %881 = vrot.lane.b32.xlu0 %v874, 113
        %v882 = vpop.permute.xlu0 %881
        %883 = vrot.lane.b32.xlu0 %v875, 113
        %v884 = vpop.permute.xlu0 %883
        %v885 = vsel %vm365, %v880, %v882
        %v886 = vsel %vm365, %v882, %v884
        %889 = vst [vmem:[#allocation3 + $0x60] sm:$0xff] %v885
        %890 = vst [vmem:[#allocation3 + $0x68] sm:$0xff] %v886
        %v891 = vld [vmem:[#allocation2 + $0x8] sm:$0xff]
        %v892 = vld [vmem:[#allocation2 + $0x10] sm:$0xff]
        %v893 = vld [vmem:[#allocation2 + $0x18] sm:$0xff]
        %897 = vrot.lane.b32.xlu0 %v891, 112
        %v898 = vpop.permute.xlu0 %897
        %899 = vrot.lane.b32.xlu0 %v892, 112
        %v900 = vpop.permute.xlu0 %899
        %901 = vrot.lane.b32.xlu0 %v893, 112
        %v902 = vpop.permute.xlu0 %901
        %v903 = vsel %vm524, %v898, %v900
        %v904 = vsel %vm524, %v900, %v902
        %907 = vst [vmem:[#allocation3 + $0x70] sm:$0xff] %v903
        %908 = vst [vmem:[#allocation3 + $0x78] sm:$0xff] %v904
        %v909 = vld [vmem:[#allocation2 + $0x8] sm:$0xff]
        %v910 = vld [vmem:[#allocation2 + $0x10] sm:$0xff]
        %v911 = vld [vmem:[#allocation2 + $0x18] sm:$0xff]
        %v912 = vld [vmem:[%s350] ss:$2 sm:$0x3]
        %v914 = vlaneseq
        %v915 = vshrl.u32 %v914, 7
        %v916 = vsub.s32 0, %v915
        %v917 = vrot.slane %v912, %v916
        %v918 = vlaneseq
        %v919 = vshrl.u32 %v918, 7
        %v920 = vsub.s32 1, %v919
        %v921 = vrot.slane %v912, %v920
        %922 = vrot.lane.b32.xlu0 %v917, 17
        %v923 = vpop.permute.xlu0 %922
        %924 = vrot.lane.b32.xlu0 %v921, 17
        %v925 = vpop.permute.xlu0 %924
        %v926 = vsel %vm321, %v923, %v925
        %v930 = vmul.f32 %v909, %v923
        %v931 = vmul.f32 %v910, %v926
        %v932 = vmul.f32 %v911, %v925
        %936 = vrot.lane.b32.xlu0 %v930, 111
        %v937 = vpop.permute.xlu0 %936
        %938 = vrot.lane.b32.xlu0 %v931, 111
        %v939 = vpop.permute.xlu0 %938
        %940 = vrot.lane.b32.xlu0 %v932, 111
        %v941 = vpop.permute.xlu0 %940
        %v942 = vsel %vm304, %v937, %v939
        %v943 = vsel %vm304, %v939, %v941
        %946 = vst [vmem:[#allocation3 + $0x80] sm:$0xff] %v942
        %947 = vst [vmem:[#allocation3 + $0x88] sm:$0xff] %v943
        %v948 = vld [vmem:[%s4] sm:$0xff]
        %v949 = vld [vmem:[#allocation3] sm:$0xff]
        %v950 = vld [vmem:[#allocation3 + $0x8] sm:$0xff]
        %v951 = vld [vmem:[#allocation3 + $0x10] sm:$0xff]
        %v952 = vld [vmem:[#allocation3 + $0x18] sm:$0xff]
        %v953 = vld [vmem:[#allocation3 + $0x20] sm:$0xff]
        %v954 = vld [vmem:[#allocation3 + $0x28] sm:$0xff]
        %v955 = vld [vmem:[#allocation3 + $0x30] sm:$0xff]
        %v956 = vld [vmem:[#allocation3 + $0x38] sm:$0xff]
        %v957 = vld [vmem:[#allocation3 + $0x40] sm:$0xff]
        %v958 = vld [vmem:[#allocation3 + $0x48] sm:$0xff]
        %v959 = vld [vmem:[#allocation3 + $0x50] sm:$0xff]
        %v960 = vld [vmem:[#allocation3 + $0x58] sm:$0xff]
        %v961 = vld [vmem:[#allocation3 + $0x60] sm:$0xff]
        %v962 = vld [vmem:[#allocation3 + $0x68] sm:$0xff]
        %v963 = vld [vmem:[#allocation3 + $0x70] sm:$0xff]
        %v964 = vld [vmem:[#allocation3 + $0x78] sm:$0xff]
        %v965 = vld [vmem:[#allocation3 + $0x80] sm:$0xff]
        %v966 = vld [vmem:[#allocation3 + $0x88] sm:$0xff]
        %v967 = vld [vmem:[%s5] sm:$0xff]
        %969 = vset.pattern.permute.xlu0 0
        %970 = vperm.xlu0 %969, %v967
        %v971 = vpop.permute.xlu0 %970
        %v974 = vsel %vm595, %v948, 0
        %976 = vmatprep.subr.mxu0 0.0
        %977 = vmatpush1.msra.mxu0 0.0
        %978 = vmatprep.subr.mxu0 0.0
        %979 = vmatpush1.msra.mxu0 0.0
        %980 = vmatprep.subr.mxu0 0.0
        %981 = vmatpush1.msra.mxu0 0.0
        %982 = vmatprep.subr.mxu0 0.0
        %983 = vmatpush1.msra.mxu0 0.0
        %984 = vmatprep.subr.mxu0 0.0
        %985 = vmatpush1.msra.mxu0 0.0
        %986 = vmatprep.subr.mxu0 0.0
        %987 = vmatpush1.msra.mxu0 0.0
        %988 = vmatprep.subr.mxu0 0.0
        %989 = vmatpush1.msra.mxu0 0.0
        %990 = vmatprep.subr.mxu0 %v966
        %991 = vmatpush1.msra.mxu0 %v965
        %992 = vmatprep.subr.mxu0 %v964
        %993 = vmatpush1.msra.mxu0 %v963
        %994 = vmatprep.subr.mxu0 %v962
        %995 = vmatpush1.msra.mxu0 %v961
        %996 = vmatprep.subr.mxu0 %v960
        %997 = vmatpush1.msra.mxu0 %v959
        %998 = vmatprep.subr.mxu0 %v958
        %999 = vmatpush1.msra.mxu0 %v957
        %1000 = vmatprep.subr.mxu0 %v956
        %1001 = vmatpush1.msra.mxu0 %v955
        %1002 = vmatprep.subr.mxu0 %v954
        %1003 = vmatpush1.msra.mxu0 %v953
        %1004 = vmatprep.subr.mxu0 %v952
        %1005 = vmatpush1.msra.mxu0 %v951
        %1006 = vmatprep.subr.mxu0 %v950
        %1007 = vmatpush1.msra.mxu0 %v949
        %1008 = vmatprep.subr.mxu0 0.0
        %1009 = vmatpush2.msra.mxu0 0.0
        %1010 = vmatprep.subr.mxu0 0.0
        %1011 = vmatpush2.msra.mxu0 0.0
        %1012 = vmatprep.subr.mxu0 0.0
        %1013 = vmatpush2.msra.mxu0 0.0
        %1014 = vmatprep.subr.mxu0 0.0
        %1015 = vmatpush2.msra.mxu0 0.0
        %1016 = vmatprep.subr.mxu0 0.0
        %1017 = vmatpush2.msra.mxu0 0.0
        %1018 = vmatprep.subr.mxu0 0.0
        %1019 = vmatpush2.msra.mxu0 0.0
        %1020 = vmatprep.subr.mxu0 0.0
        %1021 = vmatpush2.msra.mxu0 0.0
        %1022 = vmatprep.subr.mxu0 0.0
        %1023 = vmatpush2.msra.mxu0 0.0
        %1024 = vmatprep.subr.mxu0 0.0
        %1025 = vmatpush2.msra.mxu0 0.0
        %1026 = vmatprep.subr.mxu0 0.0
        %1027 = vmatpush2.msra.mxu0 0.0
        %1028 = vmatprep.subr.mxu0 0.0
        %1029 = vmatpush2.msra.mxu0 0.0
        %1030 = vmatprep.subr.mxu0 0.0
        %1031 = vmatpush2.msra.mxu0 0.0
        %1032 = vmatprep.subr.mxu0 0.0
        %1033 = vmatpush2.msra.mxu0 0.0
        %1034 = vmatprep.subr.mxu0 0.0
        %1035 = vmatpush2.msra.mxu0 0.0
        %1036 = vmatprep.subr.mxu0 0.0
        %1037 = vmatpush2.msra.mxu0 0.0
        %1038 = vmatprep.subr.mxu0 0.0
        %1039 = vmatpush2.msra.mxu0 0.0
        %1040 = vmatprep.mubr.f32.mxu0 0.0
        %1041 = vmatmul.mubr.f32.gmra.mxu0 %v974
        %v1042 = vpop.f32.mrf.mxu0
        %v1043 = vadd.f32 %v971, %v1042
        %v1044 = vpop.f32.mrf.mxu0
        %v1045 = vadd.f32 %v971, %v1044
        %1046 = vdwg.mxu0
        %v1047 = vld [vmem:[%s248] sm:$0xff]
        %v1048 = vld [vmem:[%s248 + $0x8] sm:$0xff]
        %v1049 = vadd.f32 %v1043, %v1047
        %v1050 = vadd.f32 %v1045, %v1048
        %v1051 = vmax.f32 %v1049, 0.0
        %v1052 = vmax.f32 %v1050, 0.0
        %1053 = vst [vmem:[%s280] sm:$0xff] %v1051
        %1054 = vst [vmem:[%s280 + $0x8] sm:$0xff] %v1052
        %s1055 = sand.u32 %s163, 1
        %s1056 = scalar_lea.sflag [#allocation6], %s1055
        %s1057 = sand.u32 %s163, 1
        %s1058 = smul.addr %s1057, 16
        %s1059 = scalar_lea.vmem [#allocation9], %s1058
        // Predicated region
        $region53: #{tpu_custom_call.1} parent=43 // pred_check
          %p1060 = pneg %p173
        $region54: #{tpu_custom_call.1} parent=43 // pred_check_branch
          %1062 = sbr.rel (%p1060) target = $region56
        $region55: #{tpu_custom_call.1} parent=43 // pred_region
          %s1064 = ssub.s32 256, 256
          %1065 = vsyncadd %s1056, %s1064
          %s1066 = smul.addr %s24, 2
          %s1067 = smul.addr %s1066, 128
          %s1068 = scalar_lea.hbm %s6, %s1067
          %s1070 = sshll.u32 %s1059, 4
          %s1071 = int_to_ptr.vmem [resolvable:$true] %s1070
          %1073 = dma.vmem_to_hbm [thread:$0]  %s1071, 256, %s1068, %s1056
        $region56: #{tpu_custom_call.1} parent=43 // pred_fallthru
          _
      $region44: #{tpu_custom_call.1} parent=5 // pred_fallthru
        _
      %p1074 = scmp.le.s32.totalorder 2, %s19
      // Predicated region
      $region57: #{tpu_custom_call.1} parent=5 // pred_check
        %p1075 = pneg %p1074
      $region58: #{tpu_custom_call.1} parent=5 // pred_check_branch
        %1077 = sbr.rel (%p1075) target = $region60
      $region59: #{tpu_custom_call.1} parent=5 // pred_region
        %s1078 = ssub.s32 %s19, 2
        // Predicated region
        $region61: #{tpu_custom_call.1} parent=59 // pred_check
          %p1079 = pneg %p179
        $region62: #{tpu_custom_call.1} parent=59 // pred_check_branch
          %1081 = sbr.rel (%p1079) target = $region64
        $region63: #{tpu_custom_call.1} parent=59 // pred_region
          %s1082 = sand.u32 %s164, 1
          %s1083 = scalar_lea.sflag [#allocation6], %s1082
          %s1084 = sand.u32 %s164, 1
          %s1085 = smul.addr %s1084, 16
          %s1086 = scalar_lea.vmem [#allocation9], %s1085
          %1087 = dma.done %s1083, 256
        $region64: #{tpu_custom_call.1} parent=59 // pred_fallthru
          _
      $region60: #{tpu_custom_call.1} parent=5 // pred_fallthru
        _
    $region6: #{tpu_custom_call.1} parent=1 // loop_footer
      %s23 = sadd.s32 1, %s19
    $region7: #{tpu_custom_call.1} parent=1 // loop_footer_branch
      %18 = sbr.rel target = $region3
    $region8: #{tpu_custom_call.1} parent=1 // loop_exit
      _
    %1088 = vsyncpa [#allocation5], 1
    %s1089 = scalar_lea.sflag [#allocation5], 1
    %1090 = vsyncpa %s1089, 1
    %1091 = vsyncpa [#allocation8], 1
    %1092 = vsyncpa [#allocation6], 1
    %s1093 = scalar_lea.sflag [#allocation6], 1
    %1094 = vsyncpa %s1093, 1

</llo_original>
